<compile_context>
chip_gen: v5e
topology: v5e:2x2
jax: 0.10.0
libtpu: 0.0.40
codegen_flags: <defaults>
</compile_context>

<pallas_src>
import functools
import math

import jax
import jax.numpy as jnp
from jax.experimental import pallas as pl
from jax.experimental.pallas import tpu as pltpu


# ----------------------------- helpers ------------------------------

def _pick_tile(dim, target, align):
    """Largest multiple of `align` that divides `dim` and is <= target, else full dim."""
    if dim <= target:
        return dim
    t = (target // align) * align
    while t >= align:
        if dim % t == 0:
            return t
        t -= align
    return dim


def _erf(x):
    # Abramowitz & Stegun 7.1.26 rational approximation, |err| <= 1.5e-7 (~f32 eps).
    a1, a2, a3, a4, a5 = 0.254829592, -0.284496736, 1.421413741, -1.453152027, 1.061405429
    p = 0.3275911
    sign = jnp.where(x >= 0.0, 1.0, -1.0)
    ax = jnp.abs(x)
    t = 1.0 / (1.0 + p * ax)
    poly = ((((a5 * t + a4) * t + a3) * t + a2) * t + a1) * t
    return sign * (1.0 - poly * jnp.exp(-ax * ax))


def _gelu_exact(x):
    return 0.5 * x * (1.0 + _erf(x * 0.7071067811865475))


# ----------------------------- Pallas kernels ------------------------------

def _dense_kernel(x_ref, w_ref, b_ref, o_ref, acc_ref, *, activation):
    @pl.when(pl.program_id(2) == 0)
    def _init():
        acc_ref[...] = jnp.zeros_like(acc_ref)

    acc_ref[...] += jnp.dot(
        x_ref[...].astype(jnp.bfloat16),        # activations cast at MXU boundary
        w_ref[...],                             # weights already bf16
        preferred_element_type=jnp.float32)

    @pl.when(pl.program_id(2) == pl.num_programs(2) - 1)
    def _finalize():
        y = acc_ref[...] + b_ref[...]
        if activation == "gelu":
            y = _gelu_exact(y)
        o_ref[...] = y


def dense(x, w, b, activation=None, *, tm=256, tn=512, tk=512):
    """y = x @ w + b (+ optional exact GELU). Tiled over (M, N, K), f32 accumulation."""
    M, K = x.shape
    K2, N = w.shape
    assert K == K2
    tm = _pick_tile(M, tm, 8)
    tn = _pick_tile(N, tn, 128)
    tk = _pick_tile(K, tk, 128)
    grid = (M // tm, N // tn, K // tk)
    return pl.pallas_call(
        functools.partial(_dense_kernel, activation=activation),
        out_shape=jax.ShapeDtypeStruct((M, N), jnp.float32),
        grid=grid,
        in_specs=[
            pl.BlockSpec((tm, tk), lambda i, j, k: (i, k)),
            pl.BlockSpec((tk, tn), lambda i, j, k: (k, j)),
            pl.BlockSpec((1, tn), lambda i, j, k: (0, j)),
        ],
        out_specs=pl.BlockSpec((tm, tn), lambda i, j, k: (i, j)),
        scratch_shapes=[pltpu.VMEM((tm, tn), jnp.float32)],
        compiler_params=pltpu.CompilerParams(
            dimension_semantics=("parallel", "parallel", "arbitrary")),
    )(x, w, b.reshape(1, N))


def _ln_kernel(*refs, has_residual):
    if has_residual:
        x_ref, r_ref, g_ref, b_ref, o_ref = refs
        x = x_ref[...] + r_ref[...]            # residual add fused into the LN kernel
    else:
        x_ref, g_ref, b_ref, o_ref = refs
        x = x_ref[...]
    mean = jnp.mean(x, axis=-1, keepdims=True)
    xc = x - mean
    var = jnp.mean(xc * xc, axis=-1, keepdims=True)
    o_ref[...] = xc * jax.lax.rsqrt(var + 1e-12) * g_ref[...] + b_ref[...]


def layernorm(x, g, b, residual=None, *, tm=256):
    """Row-tiled layernorm with optional fused residual add."""
    M, H = x.shape
    tm = _pick_tile(M, tm, 8)
    grid = (M // tm,)
    row_spec = pl.BlockSpec((tm, H), lambda i: (i, 0))
    vec_spec = pl.BlockSpec((1, H), lambda i: (0, 0))
    has_res = residual is not None
    inputs = [x] + ([residual] if has_res else []) + [g.reshape(1, H), b.reshape(1, H)]
    in_specs = [row_spec] + ([row_spec] if has_res else []) + [vec_spec, vec_spec]
    return pl.pallas_call(
        functools.partial(_ln_kernel, has_residual=has_res),
        out_shape=jax.ShapeDtypeStruct((M, H), jnp.float32),
        grid=grid,
        in_specs=in_specs,
        out_specs=row_spec,
        compiler_params=pltpu.CompilerParams(dimension_semantics=("parallel",)),
    )(*inputs)


def _attn_kernel(qkv_ref, m_ref, o_ref, *, n_heads, dh, scale):
    qkv = qkv_ref[0]                 # (S, 3H) f32; heads sliced from lanes in VMEM
    mask = m_ref[0]                  # (1, S) additive mask
    H = n_heads * dh
    for h in range(n_heads):
        q = qkv[:, h * dh:(h + 1) * dh].astype(jnp.bfloat16)
        k = qkv[:, H + h * dh:H + (h + 1) * dh].astype(jnp.bfloat16)
        v = qkv[:, 2 * H + h * dh:2 * H + (h + 1) * dh].astype(jnp.bfloat16)
        s = jax.lax.dot_general(q, k, (((1,), (1,)), ((), ())),
                                preferred_element_type=jnp.float32) * scale
        s = s + mask                                    # (S,S) + (1,S)
        s = s - jnp.max(s, axis=-1, keepdims=True)
        p = jnp.exp(s)
        p = p * pl.reciprocal(jnp.sum(p, axis=-1, keepdims=True), approx=True)
        ctx = jnp.dot(p.astype(jnp.bfloat16), v, preferred_element_type=jnp.float32)
        o_ref[0, :, h * dh:(h + 1) * dh] = ctx          # output written head-major: no HBM transpose


def attention(qkv, add_mask, n_heads, dh):
    """Multi-head softmax attention reading the fused (B,S,3H) QKV tensor directly."""
    B, S, threeH = qkv.shape
    H = n_heads * dh
    return pl.pallas_call(
        functools.partial(_attn_kernel, n_heads=n_heads, dh=dh,
                          scale=1.0 / math.sqrt(dh)),
        out_shape=jax.ShapeDtypeStruct((B, S, H), jnp.float32),
        grid=(B,),
        in_specs=[
            pl.BlockSpec((1, S, threeH), lambda b: (b, 0, 0)),
            pl.BlockSpec((1, 1, S), lambda b: (b, 0, 0)),
        ],
        out_specs=pl.BlockSpec((1, S, H), lambda b: (b, 0, 0)),
        compiler_params=pltpu.CompilerParams(dimension_semantics=("parallel",)),
    )(qkv, add_mask)


# ------------------------------ model wrapper -------------------------------

def init_params(key, cfg):
    H, I = cfg["hidden"], cfg["inter"]
    keys = iter(jax.random.split(key, 64))

    def w(shape, dtype=jnp.bfloat16):
        return (0.02 * jax.random.normal(next(keys), shape, dtype=jnp.float32)).astype(dtype)

    params = {
        "word_emb": w((cfg["vocab"], H), jnp.float32),
        "pos_emb": w((cfg["max_pos"], H), jnp.float32),
        "type_emb": w((cfg["type_vocab"], H), jnp.float32),
        "emb_ln_g": jnp.ones((H,), jnp.float32),
        "emb_ln_b": jnp.zeros((H,), jnp.float32),
        "layers": [],
        "clf_w": w((H, 1), jnp.float32),
        "clf_b": jnp.zeros((1,), jnp.float32),
    }
    for _ in range(cfg["layers"]):
        params["layers"].append({
            # fused QKV projection weight (bf16 for the MXU)
            "w_qkv": w((H, 3 * H)), "b_qkv": jnp.zeros((3 * H,), jnp.float32),
            "wo": w((H, H)), "bo": jnp.zeros((H,), jnp.float32),
            "ln1_g": jnp.ones((H,), jnp.float32), "ln1_b": jnp.zeros((H,), jnp.float32),
            "wi": w((H, I)), "bi": jnp.zeros((I,), jnp.float32),
            "wo2": w((I, H)), "bo2": jnp.zeros((H,), jnp.float32),
            "ln2_g": jnp.ones((H,), jnp.float32), "ln2_b": jnp.zeros((H,), jnp.float32),
        })
    return params


def bert_flat_classifier(params, input_ids, attention_mask, token_type_ids, cfg):
    B, S = input_ids.shape
    H = cfg["hidden"]
    nH = cfg["heads"]
    Dh = H // nH

    # Embeddings (gather is JAX glue) + layernorm kernel.
    pos = jnp.arange(S)
    emb = (params["word_emb"][input_ids]
           + params["pos_emb"][pos][None, :, :]
           + params["type_emb"][token_type_ids])
    h = layernorm(emb.reshape(B * S, H), params["emb_ln_g"], params["emb_ln_b"])

    # Additive attention mask (B, 1, S).
    add_mask = ((1.0 - attention_mask.astype(jnp.float32)) * -1e9).reshape(B, 1, S)

    for lyr in params["layers"]:
        qkv = dense(h, lyr["w_qkv"], lyr["b_qkv"])                 # (B*S, 3H)
        ctx = attention(qkv.reshape(B, S, 3 * H), add_mask, nH, Dh)  # (B, S, H)
        attn_out = dense(ctx.reshape(B * S, H), lyr["wo"], lyr["bo"])
        h = layernorm(attn_out, lyr["ln1_g"], lyr["ln1_b"], residual=h)
        ff = dense(h, lyr["wi"], lyr["bi"], activation="gelu")
        ff = dense(ff, lyr["wo2"], lyr["bo2"])
        h = layernorm(ff, lyr["ln2_g"], lyr["ln2_b"], residual=h)

    # x = outputs.last_hidden_state[:, 0, :]
    x = h.reshape(B, S, H)[:, 0, :]
    # self.dropout(x): eval-mode dropout is the identity.
    # logits = self.clf(x).squeeze()  -- tiny (B,H)x(H,1) matvec: plain JAX (lane-sparse
    # N=1 output is an anti-pattern for a Pallas out_spec).
    logits = (x @ params["clf_w"] + params["clf_b"]).squeeze()
    return logits


if __name__ == "__main__":
    cfg = dict(vocab=100, hidden=32, heads=2, inter=64, layers=2,
               max_pos=16, type_vocab=2)
    B, S = 2, 8

    key = jax.random.PRNGKey(0)
    kp, kid = jax.random.split(key)
    params = init_params(kp, cfg)

    input_ids = jax.random.randint(kid, (B, S), 0, cfg["vocab"], dtype=jnp.int32)
    attention_mask = jnp.ones((B, S), dtype=jnp.int32)
    token_type_ids = jnp.zeros((B, S), dtype=jnp.int32)

    logits = bert_flat_classifier(params, input_ids, attention_mask,
                                  token_type_ids, cfg)
    jax.block_until_ready(logits)
    assert logits.shape == (B,), logits.shape
    assert logits.dtype == jnp.float32
    print("KERNEL_OK")
</pallas_src>

<mosaic_0001>
module attributes {stable_mosaic.version = 11 : i64} {
  func.func @_ln_kernel(%arg0: i32, %arg1: memref<16x32xf32, #tpu.memory_space<vmem>>, %arg2: memref<1x32xf32, #tpu.memory_space<vmem>>, %arg3: memref<1x32xf32, #tpu.memory_space<vmem>>, %arg4: memref<16x32xf32, #tpu.memory_space<vmem>>) attributes {dimension_semantics = [#tpu.dimension_semantics<parallel>], iteration_bounds = array<i64: 1>, scalar_prefetch = 0 : i64, scratch_operands = 0 : i64, tpu.core_type = #tpu.core_type<tc>, window_params = [{transform_indices = @transform_0, window_bounds = array<i64: 16, 32>}, {pipeline_mode = #tpu.pipeline_mode<synchronous>, transform_indices = @transform_1, window_bounds = array<i64: 1, 32>}, {pipeline_mode = #tpu.pipeline_mode<synchronous>, transform_indices = @transform_2, window_bounds = array<i64: 1, 32>}, {transform_indices = @transform_3, window_bounds = array<i64: 16, 32>}]} {
    %c0 = arith.constant 0 : index
    %c0_0 = arith.constant 0 : index
    %0 = vector.load %arg1[%c0, %c0_0] : memref<16x32xf32, #tpu.memory_space<vmem>>, vector<16x32xf32>
    %cst = arith.constant dense<0.000000e+00> : vector<16xf32>
    %1 = vector.multi_reduction <add>, %0, %cst [1] : vector<16x32xf32> to vector<16xf32>
    %2 = vector.shape_cast %1 : vector<16xf32> to vector<16x1xf32>
    %cst_1 = arith.constant 3.200000e+01 : f32
    %3 = vector.broadcast %cst_1 : f32 to vector<16x1xf32>
    %4 = arith.divf %2, %3 : vector<16x1xf32>
    %5 = vector.broadcast %4 : vector<16x1xf32> to vector<16x32xf32>
    %6 = arith.subf %0, %5 : vector<16x32xf32>
    %7 = arith.mulf %6, %6 : vector<16x32xf32>
    %cst_2 = arith.constant dense<0.000000e+00> : vector<16xf32>
    %8 = vector.multi_reduction <add>, %7, %cst_2 [1] : vector<16x32xf32> to vector<16xf32>
    %9 = vector.shape_cast %8 : vector<16xf32> to vector<16x1xf32>
    %cst_3 = arith.constant 3.200000e+01 : f32
    %10 = vector.broadcast %cst_3 : f32 to vector<16x1xf32>
    %11 = arith.divf %9, %10 : vector<16x1xf32>
    %cst_4 = arith.constant 9.99999996E-13 : f32
    %12 = vector.broadcast %cst_4 : f32 to vector<16x1xf32>
    %13 = arith.addf %11, %12 : vector<16x1xf32>
    %14 = math.rsqrt %13 : vector<16x1xf32>
    %15 = vector.broadcast %14 : vector<16x1xf32> to vector<16x32xf32>
    %16 = arith.mulf %6, %15 : vector<16x32xf32>
    %c0_5 = arith.constant 0 : index
    %c0_6 = arith.constant 0 : index
    %17 = vector.load %arg2[%c0_5, %c0_6] : memref<1x32xf32, #tpu.memory_space<vmem>>, vector<1x32xf32>
    %18 = vector.broadcast %17 : vector<1x32xf32> to vector<16x32xf32>
    %19 = arith.mulf %16, %18 : vector<16x32xf32>
    %c0_7 = arith.constant 0 : index
    %c0_8 = arith.constant 0 : index
    %20 = vector.load %arg3[%c0_7, %c0_8] : memref<1x32xf32, #tpu.memory_space<vmem>>, vector<1x32xf32>
    %21 = vector.broadcast %20 : vector<1x32xf32> to vector<16x32xf32>
    %22 = arith.addf %19, %21 : vector<16x32xf32>
    %c0_9 = arith.constant 0 : index
    %c0_10 = arith.constant 0 : index
    %23 = vector.load %arg4[%c0_9, %c0_10] : memref<16x32xf32, #tpu.memory_space<vmem>>, vector<16x32xf32>
    tpu.vector_store %arg4[%c0_9, %c0_10], %22 {strides = array<i32>} : memref<16x32xf32, #tpu.memory_space<vmem>>, vector<16x32xf32>,
    return
  }
  func.func @transform_0(%arg0: i32) -> (i32, i32) {
    %c0_i32 = arith.constant 0 : i32
    %c0_i32_0 = arith.constant 0 : i32
    return %arg0, %c0_i32 : i32, i32
  }
  func.func @transform_1(%arg0: i32) -> (i32, i32) {
    %c0_i32 = arith.constant 0 : i32
    %c0_i32_0 = arith.constant 0 : i32
    %c0_i32_1 = arith.constant 0 : i32
    return %c0_i32, %c0_i32_0 : i32, i32
  }
  func.func @transform_2(%arg0: i32) -> (i32, i32) {
    %c0_i32 = arith.constant 0 : i32
    %c0_i32_0 = arith.constant 0 : i32
    %c0_i32_1 = arith.constant 0 : i32
    return %c0_i32, %c0_i32_0 : i32, i32
  }
  func.func @transform_3(%arg0: i32) -> (i32, i32) {
    %c0_i32 = arith.constant 0 : i32
    %c0_i32_0 = arith.constant 0 : i32
    return %arg0, %c0_i32 : i32, i32
  }
}

</mosaic_0001>

<llo_original>
// kernel: tpu_custom_call.1
$region0: #{tpu_custom_call.1}
  #allocation0 [shape = 'u32[]', space=smem, size = 0x4, offset = 0x4, fixed_abs, tag = 'smem constant byte address 0x4 - core index']
  #allocation1 [shape = 'u32[72,128]{1,0:T(1,128)}', space=vmem, size = 0x9000, scoped, tag = 'internal scratch']
  %s0 = inlined_call_operand.hbm [shape: f32[16,32], index: 0, kind: input, shape index: {}]
  %s1 = inlined_call_operand.hbm [shape: f32[1,32], index: 1, kind: input, shape index: {}]
  %s2 = inlined_call_operand.vmem [shape: f32[1,32], index: 2, kind: input, shape index: {}]
  %s3 = inlined_call_operand.hbm [shape: f32[16,32], index: 3, kind: output, shape index: {}]
  %s4 = sld [smem:[#allocation0]]
  $region30: #{tpu_custom_call.1} parent=0
    _
  %s6 = ssub.s32 1, %s4
  %s7 = scalar_select 0, %s6, %s4
  $region1: #{tpu_custom_call.1} parent=0
    #allocation2 [shape = 'u8[8192]{0}', space=vmem, size = 0x2000, scoped, tag = 'input window, operand 0, single buffered']
    #allocation3 [shape = 's32[1]{0}', space=sflag, size = 0x4, scoped, tag = 'scoped memory for tpu_custom_call.1']
    #allocation4 [shape = 's32[1]{0}', space=sflag, size = 0x4, scoped, tag = 'scoped memory for tpu_custom_call.1']
    #allocation5 [shape = 'u8[512]{0}', space=vmem, size = 0x400, scoped, tag = 'input window, operand 1, single buffered']
    #allocation6 [shape = 's32[1]{0}', space=sflag, size = 0x4, scoped, tag = 'scoped memory for tpu_custom_call.1']
    #allocation7 [shape = 'u8[8192]{0}', space=vmem, size = 0x2000, scoped, tag = 'output window, operand 0, single buffered']
    %8 = vsyncpa [#allocation3], 0
    %9 = vsyncpa [#allocation6], 0
    %10 = vsyncpa [#allocation4], 0
    // Predicated region
    $region2: #{tpu_custom_call.1} parent=1 // pred_check
      _
    $region3: #{tpu_custom_call.1} parent=1 // pred_check_branch
      %12 = sbr.rel (0) target = $region5
    $region4: #{tpu_custom_call.1} parent=1 // pred_region
      %14 = vsyncadd [#allocation3], 0
      %s15 = sshll.u32 %s0, 4
      %s16 = int_to_ptr.hbm [resolvable:$true] %s15
      %s17 = sshll.u32 [#allocation2], 4
      %s18 = int_to_ptr.vmem [resolvable:$true] %s17
      %23 = dma.hbm_to_vmem [thread:$0]  %s16, 256, %s18, [#allocation3], 128, 128, 8
    $region5: #{tpu_custom_call.1} parent=1 // pred_fallthru
      _
    // Predicated region
    $region6: #{tpu_custom_call.1} parent=1 // pred_check
      _
    $region7: #{tpu_custom_call.1} parent=1 // pred_check_branch
      %25 = sbr.rel (0) target = $region9
    $region8: #{tpu_custom_call.1} parent=1 // pred_region
      %27 = vsyncadd [#allocation6], 0
      %s29 = sshll.u32 %s1, 4
      %s30 = int_to_ptr.hbm [resolvable:$true] %s29
      %s31 = sshll.u32 [#allocation5], 4
      %s32 = int_to_ptr.vmem [resolvable:$true] %s31
      %34 = dma.hbm_to_vmem [thread:$0]  %s30, 16, %s32, [#allocation6]
    $region9: #{tpu_custom_call.1} parent=1 // pred_fallthru
      _
    // Predicated region
    $region10: #{tpu_custom_call.1} parent=1 // pred_check
      _
    $region11: #{tpu_custom_call.1} parent=1 // pred_check_branch
      %36 = sbr.rel (0) target = $region13
    $region12: #{tpu_custom_call.1} parent=1 // pred_region
      _
    $region13: #{tpu_custom_call.1} parent=1 // pred_fallthru
      _
    // Predicated region
    $region14: #{tpu_custom_call.1} parent=1 // pred_check
      _
    $region15: #{tpu_custom_call.1} parent=1 // pred_check_branch
      %38 = sbr.rel (0) target = $region17
    $region16: #{tpu_custom_call.1} parent=1 // pred_region
      %40 = dma.done [#allocation3], 256
    $region17: #{tpu_custom_call.1} parent=1 // pred_fallthru
      _
    // Predicated region
    $region18: #{tpu_custom_call.1} parent=1 // pred_check
      _
    $region19: #{tpu_custom_call.1} parent=1 // pred_check_branch
      %42 = sbr.rel (0) target = $region21
    $region20: #{tpu_custom_call.1} parent=1 // pred_region
      %44 = dma.done [#allocation6], 16
    $region21: #{tpu_custom_call.1} parent=1 // pred_fallthru
      _
    %v45 = vld [vmem:[#allocation2] sm:$0xff]
    %v46 = vld [vmem:[#allocation2 + $0x8] sm:$0xff]
    %vm47 = vcmask 261120
    %v48 = vsel %vm47, %v45, 0.0
    %49 = vadd.xlane.f32.xlu0 %v48
    %v50 = vpop.xlane.xlu0 %49
    %v51 = vsel %vm47, %v46, 0.0
    %52 = vadd.xlane.f32.xlu0 %v51
    %v53 = vpop.xlane.xlu0 %52
    %v54 = vrcp.pop 32.0
    %v55 = vmul.f32 32.0, %v54
    %v56 = vsub.f32 1.0, %v55
    %v57 = vmul.f32 %v54, %v56
    %v58 = vadd.f32 %v54, %v57
    %vm59 = vweird.f32 %v54
    %v60 = vsel %vm59, %v54, %v58
    %v61 = vmul.f32 %v50, %v60
    %v62 = vmul.f32 %v53, %v60
    %v63 = vsub.f32 %v45, %v61
    %v64 = vsub.f32 %v46, %v62
    %v65 = vmul.f32 %v63, %v63
    %v66 = vmul.f32 %v64, %v64
    %v67 = vsel %vm47, %v65, 0.0
    %68 = vadd.xlane.f32.xlu0 %v67
    %v69 = vpop.xlane.xlu0 %68
    %v70 = vsel %vm47, %v66, 0.0
    %71 = vadd.xlane.f32.xlu0 %v70
    %v72 = vpop.xlane.xlu0 %71
    %v73 = vmul.f32 %v69, %v60
    %v74 = vmul.f32 %v72, %v60
    %v75 = vadd.f32 %v73, 1e-12
    %v76 = vadd.f32 %v74, 1e-12
    %v77 = vrsqrt.pop %v75
    %v78 = vmul.f32 %v77, %v75
    %v79 = vmul.f32 %v78, %v77
    %v80 = vmul.f32 0.5, %v79
    %v81 = vsub.f32 1.5, %v80
    %v82 = vmul.f32 %v77, %v81
    %vm83 = vweird.f32 %v75
    %vm84 = vweird.f32 %v77
    %vm85 = vmor %vm83, %vm84
    %v86 = vsel %vm85, %v77, %v82
    %v87 = vrsqrt.pop %v76
    %v88 = vmul.f32 %v87, %v76
    %v89 = vmul.f32 %v88, %v87
    %v90 = vmul.f32 0.5, %v89
    %v91 = vsub.f32 1.5, %v90
    %v92 = vmul.f32 %v87, %v91
    %vm93 = vweird.f32 %v76
    %vm94 = vweird.f32 %v87
    %vm95 = vmor %vm93, %vm94
    %v96 = vsel %vm95, %v87, %v92
    %v97 = vmul.f32 %v63, %v86
    %v98 = vmul.f32 %v64, %v96
    %v99 = vld [vmem:[#allocation5] sm:$0x1]
    %v101 = vperm.slane %v99, 0
    %v103 = vmul.f32 %v97, %v101
    %v104 = vmul.f32 %v98, %v101
    %v105 = vld [vmem:[%s2] sm:$0x1]
    %v107 = vperm.slane %v105, 0
    %v109 = vadd.f32 %v103, %v107
    %v110 = vadd.f32 %v104, %v107
    %111 = vst.msk [vmem:[#allocation7] sm:$0xff] %vm47, %v109
    %112 = vst.msk [vmem:[#allocation7 + $0x8] sm:$0xff] %vm47, %v110
    // Predicated region
    $region22: #{tpu_custom_call.1} parent=1 // pred_check
      _
    $region23: #{tpu_custom_call.1} parent=1 // pred_check_branch
      %114 = sbr.rel (0) target = $region25
    $region24: #{tpu_custom_call.1} parent=1 // pred_region
      %116 = vsyncadd [#allocation4], 0
      %s117 = sshll.u32 [#allocation7], 4
      %s118 = int_to_ptr.vmem [resolvable:$true] %s117
      %s119 = sshll.u32 %s3, 4
      %s120 = int_to_ptr.hbm [resolvable:$true] %s119
      %125 = dma.vmem_to_hbm [thread:$0]  %s118, 256, %s120, [#allocation4], 128, 128, 8
    $region25: #{tpu_custom_call.1} parent=1 // pred_fallthru
      _
    // Predicated region
    $region26: #{tpu_custom_call.1} parent=1 // pred_check
      _
    $region27: #{tpu_custom_call.1} parent=1 // pred_check_branch
      %127 = sbr.rel (0) target = $region29
    $region28: #{tpu_custom_call.1} parent=1 // pred_region
      %129 = dma.done [#allocation4], 256
    $region29: #{tpu_custom_call.1} parent=1 // pred_fallthru
      _
    %130 = vsyncpa [#allocation3], 1
    %131 = vsyncpa [#allocation6], 1
    %132 = vsyncpa [#allocation4], 1

</llo_original>
